<compile_context>
chip_gen: v6e
topology: v6e:2x2x1
jax: 0.10.0
libtpu: 0.0.40
codegen_flags: <defaults>
</compile_context>

<pallas_src>
import numpy as np
import jax
import jax.numpy as jnp
from jax import lax
from jax.experimental import pallas as pl
from jax.experimental.pallas import tpu as pltpu


# ----------------------------------------------------------------------------
# Fused Pallas kernel: conv1(as matmul)+bias+ReLU  ->  folded conv2+Linear
#                      -> sigmoid.  Two MXU matmuls, all VMEM resident.
# ----------------------------------------------------------------------------
def _reward_fused_kernel(x_ref, w1_ref, b1_ref, w2_ref, c_ref, o_ref):
    # Conv1 as a single matmul (the 2x2 kernel exactly covers the 2x2 input).
    h = jnp.dot(x_ref[...], w1_ref[...], preferred_element_type=jnp.float32)
    h = jnp.maximum(h + b1_ref[...], 0.0)                       # ReLU
    # Conv2 (1x1, stride 2, pad 1) + view(-1,4) + Linear(4,2): purely linear,
    # pre-folded into a single (32,2) matmul + bias (exact algebra).
    z = jnp.dot(h, w2_ref[...], preferred_element_type=jnp.float32) + c_ref[...]
    o_ref[...] = 1.0 / (1.0 + jnp.exp(-z))                      # Sigmoid


def _round_up(n, m):
    return ((n + m - 1) // m) * m


def reward_conv_forward(prep, x_nchw):
    """prep = prepare_weights(params); x_nchw: (B, 32, 2, 2) float32."""
    w1m, b1r, w2f, cf = prep
    B, C, H, W = x_nchw.shape
    x_flat = x_nchw.reshape(B, C * H * W).astype(jnp.float32)   # (B, 128)

    # Tile the batch: one 8-row-aligned block for small B, 256-row blocks
    # (megacore "parallel") for large B.  Pad rows so every block is full.
    TM = min(256, _round_up(B, 8))
    B_pad = _round_up(B, TM)
    if B_pad != B:
        x_flat = jnp.pad(x_flat, ((0, B_pad - B), (0, 0)))
    grid = (B_pad // TM,)

    out = pl.pallas_call(
        _reward_fused_kernel,
        out_shape=jax.ShapeDtypeStruct((B_pad, 2), jnp.float32),
        grid_spec=pltpu.PrefetchScalarGridSpec(
            num_scalar_prefetch=0,
            grid=grid,
            in_specs=[
                pl.BlockSpec((TM, C * H * W), lambda i: (i, 0)),   # x tile
                pl.BlockSpec((C * H * W, 32), lambda i: (0, 0)),   # W1 (resident)
                pl.BlockSpec((1, 32), lambda i: (0, 0)),           # b1
                pl.BlockSpec((32, 2), lambda i: (0, 0)),           # folded W2
                pl.BlockSpec((1, 2), lambda i: (0, 0)),            # folded bias
            ],
            out_specs=pl.BlockSpec((TM, 2), lambda i: (i, 0)),
        ),
        compiler_params=pltpu.CompilerParams(
            dimension_semantics=("parallel",)),
    )(x_flat, w1m, b1r, w2f, cf)

    out = out[:B]
    return out[:, 0], out[:, 1]


# ----------------------------------------------------------------------------
# One-time weight re-layout / algebraic fusion (outside the forward hot path)
# ----------------------------------------------------------------------------
def prepare_weights(p):
    c1_w, c1_b = p["c1_w"], p["c1_b"]          # (32,32,2,2), (32,)
    c2_w, c2_b = p["c2_w"], p["c2_b"]          # (1,32,1,1),  (1,)
    l_w, l_b = p["l_w"], p["l_b"]              # (2,4),       (2,)

    cout1, cin1, kh, kw = c1_w.shape
    # Conv1: full contraction of the (ci, kh, kw) block -> plain matmul weight.
    w1m = c1_w.reshape(cout1, cin1 * kh * kw).T.astype(jnp.float32)   # (128,32)
    b1r = c1_b.reshape(1, cout1).astype(jnp.float32)                  # (1,32)

    # Conv1 output spatial size for a 2x2 input (k=2, s=1, no pad) is 1x1.
    H1 = W1 = 1
    # Conv2: 1x1 kernel, stride 2, padding 1  ->  output spatial 2x2.
    H2 = (H1 + 2 * 1 - 1) // 2 + 1
    W2 = (W1 + 2 * 1 - 1) // 2 + 1
    assert H1 == 1 and W1 == 1 and H2 * W2 == 4
    # TODO(synk): this conv2+Linear fold assumes the 1x1 conv1 output implied
    # by view(-1, 4) on 2x2 NCHW inputs; other spatial sizes would need a
    # per-location (im2col) contraction before the selection matrix.

    # Selection matrix: conv2 output position (oh, ow) samples unpadded
    # conv1-output location (2*oh-1, 2*ow-1); out-of-range means it samples
    # zero padding (all-zero column).
    sel = np.zeros((H1 * W1, H2 * W2), dtype=np.float32)
    for oh in range(H2):
        for ow in range(W2):
            ih, iw = 2 * oh - 1, 2 * ow - 1
            if 0 <= ih < H1 and 0 <= iw < W1:
                sel[ih * W1 + iw, oh * W2 + ow] = 1.0
    sel = jnp.asarray(sel)                                           # (1,4)

    w2col = c2_w.reshape(1, cin1).T.astype(jnp.float32)              # (32,1)
    wlT = l_w.T.astype(jnp.float32)                                  # (4,2)
    # Fold conv2 -> view -> Linear into one affine map acting on h:
    w2f = w2col @ (sel @ wlT)                                        # (32,2)
    cf = (c2_b.reshape(1, 1).astype(jnp.float32)
          * jnp.ones((1, H2 * W2), jnp.float32)) @ wlT \
        + l_b.reshape(1, 2).astype(jnp.float32)                      # (1,2)
    return w1m, b1r, w2f, cf


# ----------------------------------------------------------------------------
# Pure-JAX reference (correctness check only)
# ----------------------------------------------------------------------------
def ref_forward(p, x):
    t = lax.conv_general_dilated(
        x, p["c1_w"], (1, 1), [(0, 0), (0, 0)],
        dimension_numbers=("NCHW", "OIHW", "NCHW"))
    t = jnp.maximum(t + p["c1_b"].reshape(1, -1, 1, 1), 0.0)
    t = lax.conv_general_dilated(
        t, p["c2_w"], (2, 2), [(1, 1), (1, 1)],
        dimension_numbers=("NCHW", "OIHW", "NCHW"))
    t = t + p["c2_b"].reshape(1, -1, 1, 1)
    v = t.reshape(-1, 4) @ p["l_w"].T + p["l_b"]
    v = 1.0 / (1.0 + jnp.exp(-v))
    return v[:, 0], v[:, 1]


# ----------------------------------------------------------------------------
# Deterministic parameter init (PyTorch-layout shapes)
# ----------------------------------------------------------------------------
def init_params(key):
    shapes = {
        "c1_w": (32, 32, 2, 2), "c1_b": (32,),
        "c2_w": (1, 32, 1, 1),  "c2_b": (1,),
        "l_w": (2, 4),          "l_b": (2,),
    }
    params = {}
    keys = jax.random.split(key, len(shapes))
    for k_, (name, shp) in zip(keys, sorted(shapes.items())):
        params[name] = (0.1 * jax.random.normal(k_, shp)).astype(jnp.float32)
    return params


if __name__ == "__main__":
    key = jax.random.PRNGKey(0)
    k_p, k_x = jax.random.split(key)

    B = 2
    params = init_params(k_p)
    x = jax.random.normal(k_x, (B, 32, 2, 2), dtype=jnp.float32)   # NCHW

    prep = prepare_weights(params)          # weight re-layout done once
    v0, v1 = reward_conv_forward(prep, x)
    v0, v1 = jax.block_until_ready((v0, v1))
    assert v0.shape == (B,) and v1.shape == (B,), (v0.shape, v1.shape)

    r0, r1 = jax.block_until_ready(ref_forward(params, x))
    assert jnp.allclose(v0, r0, rtol=1e-3, atol=1e-3), \
        float(jnp.max(jnp.abs(v0 - r0)))
    assert jnp.allclose(v1, r1, rtol=1e-3, atol=1e-3), \
        float(jnp.max(jnp.abs(v1 - r1)))

    print("KERNEL_OK")
</pallas_src>

<mosaic_0001>
module attributes {stable_mosaic.version = 11 : i64} {
  func.func @_reward_fused_kernel(%arg0: i32, %arg1: memref<8x128xf32, #tpu.memory_space<vmem>>, %arg2: memref<128x32xf32, #tpu.memory_space<vmem>>, %arg3: memref<1x32xf32, #tpu.memory_space<vmem>>, %arg4: memref<32x2xf32, #tpu.memory_space<vmem>>, %arg5: memref<1x2xf32, #tpu.memory_space<vmem>>, %arg6: memref<8x2xf32, #tpu.memory_space<vmem>>) attributes {dimension_semantics = [#tpu.dimension_semantics<parallel>], iteration_bounds = array<i64: 1>, scalar_prefetch = 0 : i64, scratch_operands = 0 : i64, tpu.core_type = #tpu.core_type<tc>, window_params = [{transform_indices = @transform_0, window_bounds = array<i64: 8, 128>}, {pipeline_mode = #tpu.pipeline_mode<synchronous>, transform_indices = @transform_1, window_bounds = array<i64: 128, 32>}, {pipeline_mode = #tpu.pipeline_mode<synchronous>, transform_indices = @transform_2, window_bounds = array<i64: 1, 32>}, {pipeline_mode = #tpu.pipeline_mode<synchronous>, transform_indices = @transform_3, window_bounds = array<i64: 32, 2>}, {pipeline_mode = #tpu.pipeline_mode<synchronous>, transform_indices = @transform_4, window_bounds = array<i64: 1, 2>}, {transform_indices = @transform_5, window_bounds = array<i64: 8, 2>}]} {
    %c0 = arith.constant 0 : index
    %c0_0 = arith.constant 0 : index
    %0 = vector.load %arg1[%c0, %c0_0] : memref<8x128xf32, #tpu.memory_space<vmem>>, vector<8x128xf32>
    %c0_1 = arith.constant 0 : index
    %c0_2 = arith.constant 0 : index
    %1 = vector.load %arg2[%c0_1, %c0_2] : memref<128x32xf32, #tpu.memory_space<vmem>>, vector<128x32xf32>
    %cst = arith.constant dense<0.000000e+00> : vector<8x32xf32>
    %2 = tpu.matmul %0, %1, %cst {dimension_numbers = #tpu.dot_dimension_numbers<[1], [0], [0], [1], [0, 0, 1, 1], [], []>} : vector<8x128xf32>, vector<128x32xf32>, vector<8x32xf32> -> vector<8x32xf32>
    %c0_3 = arith.constant 0 : index
    %c0_4 = arith.constant 0 : index
    %3 = vector.load %arg3[%c0_3, %c0_4] : memref<1x32xf32, #tpu.memory_space<vmem>>, vector<1x32xf32>
    %4 = vector.broadcast %3 : vector<1x32xf32> to vector<8x32xf32>
    %5 = arith.addf %2, %4 : vector<8x32xf32>
    %cst_5 = arith.constant 0.000000e+00 : f32
    %6 = vector.broadcast %cst_5 : f32 to vector<8x32xf32>
    %7 = arith.maximumf %5, %6 : vector<8x32xf32>
    %c0_6 = arith.constant 0 : index
    %c0_7 = arith.constant 0 : index
    %8 = vector.load %arg4[%c0_6, %c0_7] : memref<32x2xf32, #tpu.memory_space<vmem>>, vector<32x2xf32>
    %cst_8 = arith.constant dense<0.000000e+00> : vector<8x2xf32>
    %9 = tpu.matmul %7, %8, %cst_8 {dimension_numbers = #tpu.dot_dimension_numbers<[1], [0], [0], [1], [0, 0, 1, 1], [], []>} : vector<8x32xf32>, vector<32x2xf32>, vector<8x2xf32> -> vector<8x2xf32>
    %c0_9 = arith.constant 0 : index
    %c0_10 = arith.constant 0 : index
    %10 = vector.load %arg5[%c0_9, %c0_10] : memref<1x2xf32, #tpu.memory_space<vmem>>, vector<1x2xf32>
    %11 = vector.broadcast %10 : vector<1x2xf32> to vector<8x2xf32>
    %12 = arith.addf %9, %11 : vector<8x2xf32>
    %cst_11 = arith.constant 0.000000e+00 : f32
    %13 = vector.broadcast %cst_11 : f32 to vector<8x2xf32>
    %14 = arith.subf %13, %12 : vector<8x2xf32>
    %15 = math.exp %14 : vector<8x2xf32>
    %cst_12 = arith.constant 1.000000e+00 : f32
    %16 = vector.broadcast %cst_12 : f32 to vector<8x2xf32>
    %17 = arith.addf %16, %15 : vector<8x2xf32>
    %cst_13 = arith.constant 1.000000e+00 : f32
    %18 = vector.broadcast %cst_13 : f32 to vector<8x2xf32>
    %19 = arith.divf %18, %17 : vector<8x2xf32>
    %c0_14 = arith.constant 0 : index
    %c0_15 = arith.constant 0 : index
    %20 = vector.load %arg6[%c0_14, %c0_15] : memref<8x2xf32, #tpu.memory_space<vmem>>, vector<8x2xf32>
    tpu.vector_store %arg6[%c0_14, %c0_15], %19 {strides = array<i32>} : memref<8x2xf32, #tpu.memory_space<vmem>>, vector<8x2xf32>,
    return
  }
  func.func @transform_0(%arg0: i32) -> (i32, i32) {
    %c0_i32 = arith.constant 0 : i32
    %c0_i32_0 = arith.constant 0 : i32
    return %arg0, %c0_i32 : i32, i32
  }
  func.func @transform_1(%arg0: i32) -> (i32, i32) {
    %c0_i32 = arith.constant 0 : i32
    %c0_i32_0 = arith.constant 0 : i32
    %c0_i32_1 = arith.constant 0 : i32
    return %c0_i32, %c0_i32_0 : i32, i32
  }
  func.func @transform_2(%arg0: i32) -> (i32, i32) {
    %c0_i32 = arith.constant 0 : i32
    %c0_i32_0 = arith.constant 0 : i32
    %c0_i32_1 = arith.constant 0 : i32
    return %c0_i32, %c0_i32_0 : i32, i32
  }
  func.func @transform_3(%arg0: i32) -> (i32, i32) {
    %c0_i32 = arith.constant 0 : i32
    %c0_i32_0 = arith.constant 0 : i32
    %c0_i32_1 = arith.constant 0 : i32
    return %c0_i32, %c0_i32_0 : i32, i32
  }
  func.func @transform_4(%arg0: i32) -> (i32, i32) {
    %c0_i32 = arith.constant 0 : i32
    %c0_i32_0 = arith.constant 0 : i32
    %c0_i32_1 = arith.constant 0 : i32
    return %c0_i32, %c0_i32_0 : i32, i32
  }
  func.func @transform_5(%arg0: i32) -> (i32, i32) {
    %c0_i32 = arith.constant 0 : i32
    %c0_i32_0 = arith.constant 0 : i32
    return %arg0, %c0_i32 : i32, i32
  }
}

</mosaic_0001>

<llo_original>
// kernel: tpu_custom_call.1
$region0: #{tpu_custom_call.1}
  #allocation0 [shape = 'u32[]', space=smem, size = 0x4, offset = 0x4, fixed_abs, tag = 'smem constant byte address 0x4 - core index']
  #allocation1 [shape = 'u32[144,128]{1,0:T(1,128)}', space=vmem, size = 0x12000, scoped, tag = 'internal scratch']
  %s0 = inlined_call_operand.vmem [shape: f32[8,128], index: 0, kind: input, shape index: {}]
  %s1 = inlined_call_operand.vmem [shape: f32[128,32], index: 1, kind: input, shape index: {}]
  %s2 = inlined_call_operand.vmem [shape: f32[1,32], index: 2, kind: input, shape index: {}]
  %s3 = inlined_call_operand.vmem [shape: f32[32,2], index: 3, kind: input, shape index: {}]
  %s4 = inlined_call_operand.vmem [shape: f32[1,2], index: 4, kind: input, shape index: {}]
  %s5 = inlined_call_operand.vmem [shape: f32[8,2], index: 5, kind: output, shape index: {}]
  %s6 = sld [smem:[#allocation0]]
  $region30: #{tpu_custom_call.1} parent=0
    _
  %s8 = ssub.s32 1, %s6
  %s9 = scalar_select 0, %s8, %s6
  // Predicated region
  $region2: #{tpu_custom_call.1} parent=0 // pred_check
    _
  $region3: #{tpu_custom_call.1} parent=0 // pred_check_branch
    %11 = sbr.rel (0) target = $region5
  $region4: #{tpu_custom_call.1} parent=0 // pred_region
    _
  $region5: #{tpu_custom_call.1} parent=0 // pred_fallthru
    _
  // Predicated region
  $region6: #{tpu_custom_call.1} parent=0 // pred_check
    _
  $region7: #{tpu_custom_call.1} parent=0 // pred_check_branch
    %13 = sbr.rel (0) target = $region9
  $region8: #{tpu_custom_call.1} parent=0 // pred_region
    _
  $region9: #{tpu_custom_call.1} parent=0 // pred_fallthru
    _
  // Predicated region
  $region10: #{tpu_custom_call.1} parent=0 // pred_check
    _
  $region11: #{tpu_custom_call.1} parent=0 // pred_check_branch
    %15 = sbr.rel (0) target = $region13
  $region12: #{tpu_custom_call.1} parent=0 // pred_region
    _
  $region13: #{tpu_custom_call.1} parent=0 // pred_fallthru
    _
  // Predicated region
  $region14: #{tpu_custom_call.1} parent=0 // pred_check
    _
  $region15: #{tpu_custom_call.1} parent=0 // pred_check_branch
    %17 = sbr.rel (0) target = $region17
  $region16: #{tpu_custom_call.1} parent=0 // pred_region
    _
  $region17: #{tpu_custom_call.1} parent=0 // pred_fallthru
    _
  // Predicated region
  $region18: #{tpu_custom_call.1} parent=0 // pred_check
    _
  $region19: #{tpu_custom_call.1} parent=0 // pred_check_branch
    %19 = sbr.rel (0) target = $region21
  $region20: #{tpu_custom_call.1} parent=0 // pred_region
    _
  $region21: #{tpu_custom_call.1} parent=0 // pred_fallthru
    _
  %v20 = vld [vmem:[%s0] sm:$0xff]
  %v21 = vld [vmem:[%s1] sm:$0xff]
  %v22 = vld [vmem:[%s1 + $0x8] sm:$0xff]
  %v23 = vld [vmem:[%s1 + $0x10] sm:$0xff]
  %v24 = vld [vmem:[%s1 + $0x18] sm:$0xff]
  %v25 = vld [vmem:[%s1 + $0x20] sm:$0xff]
  %v26 = vld [vmem:[%s1 + $0x28] sm:$0xff]
  %v27 = vld [vmem:[%s1 + $0x30] sm:$0xff]
  %v28 = vld [vmem:[%s1 + $0x38] sm:$0xff]
  %v29 = vld [vmem:[%s1 + $0x40] sm:$0xff]
  %v30 = vld [vmem:[%s1 + $0x48] sm:$0xff]
  %v31 = vld [vmem:[%s1 + $0x50] sm:$0xff]
  %v32 = vld [vmem:[%s1 + $0x58] sm:$0xff]
  %v33 = vld [vmem:[%s1 + $0x60] sm:$0xff]
  %v34 = vld [vmem:[%s1 + $0x68] sm:$0xff]
  %v35 = vld [vmem:[%s1 + $0x70] sm:$0xff]
  %v36 = vld [vmem:[%s1 + $0x78] sm:$0xff]
  %v37 = vld [vmem:[%s2] sm:$0x1]
  %v39 = vlaneseq
  %v40 = vshrl.u32 %v39, 7
  %v41 = vsub.s32 0, %v40
  %v42 = vrot.slane %v37, %v41
  %44 = vmatprep.subr.mxu0 0.0
  %45 = vmatpush1.msra.mxu0 %v36
  %46 = vmatprep.subr.mxu0 0.0
  %47 = vmatpush1.msra.mxu0 %v35
  %48 = vmatprep.subr.mxu0 0.0
  %49 = vmatpush1.msra.mxu0 %v34
  %50 = vmatprep.subr.mxu0 0.0
  %51 = vmatpush1.msra.mxu0 %v33
  %52 = vmatprep.subr.mxu0 0.0
  %53 = vmatpush1.msra.mxu0 %v32
  %54 = vmatprep.subr.mxu0 0.0
  %55 = vmatpush1.msra.mxu0 %v31
  %56 = vmatprep.subr.mxu0 0.0
  %57 = vmatpush1.msra.mxu0 %v30
  %58 = vmatprep.subr.mxu0 0.0
  %59 = vmatpush1.msra.mxu0 %v29
  %60 = vmatprep.subr.mxu0 0.0
  %61 = vmatpush1.msra.mxu0 %v28
  %62 = vmatprep.subr.mxu0 0.0
  %63 = vmatpush1.msra.mxu0 %v27
  %64 = vmatprep.subr.mxu0 0.0
  %65 = vmatpush1.msra.mxu0 %v26
  %66 = vmatprep.subr.mxu0 0.0
  %67 = vmatpush1.msra.mxu0 %v25
  %68 = vmatprep.subr.mxu0 0.0
  %69 = vmatpush1.msra.mxu0 %v24
  %70 = vmatprep.subr.mxu0 0.0
  %71 = vmatpush1.msra.mxu0 %v23
  %72 = vmatprep.subr.mxu0 0.0
  %73 = vmatpush1.msra.mxu0 %v22
  %74 = vmatprep.subr.mxu0 0.0
  %75 = vmatpush1.msra.mxu0 %v21
  %76 = vmatprep.subr.mxu0 0.0
  %77 = vmatpush2.msra.mxu0 0.0
  %78 = vmatprep.subr.mxu0 0.0
  %79 = vmatpush2.msra.mxu0 0.0
  %80 = vmatprep.subr.mxu0 0.0
  %81 = vmatpush2.msra.mxu0 0.0
  %82 = vmatprep.subr.mxu0 0.0
  %83 = vmatpush2.msra.mxu0 0.0
  %84 = vmatprep.subr.mxu0 0.0
  %85 = vmatpush2.msra.mxu0 0.0
  %86 = vmatprep.subr.mxu0 0.0
  %87 = vmatpush2.msra.mxu0 0.0
  %88 = vmatprep.subr.mxu0 0.0
  %89 = vmatpush2.msra.mxu0 0.0
  %90 = vmatprep.subr.mxu0 0.0
  %91 = vmatpush2.msra.mxu0 0.0
  %92 = vmatprep.subr.mxu0 0.0
  %93 = vmatpush2.msra.mxu0 0.0
  %94 = vmatprep.subr.mxu0 0.0
  %95 = vmatpush2.msra.mxu0 0.0
  %96 = vmatprep.subr.mxu0 0.0
  %97 = vmatpush2.msra.mxu0 0.0
  %98 = vmatprep.subr.mxu0 0.0
  %99 = vmatpush2.msra.mxu0 0.0
  %100 = vmatprep.subr.mxu0 0.0
  %101 = vmatpush2.msra.mxu0 0.0
  %102 = vmatprep.subr.mxu0 0.0
  %103 = vmatpush2.msra.mxu0 0.0
  %104 = vmatprep.subr.mxu0 0.0
  %105 = vmatpush2.msra.mxu0 0.0
  %106 = vmatprep.subr.mxu0 0.0
  %107 = vmatpush2.msra.mxu0 0.0
  %108 = vmatprep.mubr.f32.mxu0 0.0
  %109 = vmatmul.mubr.f32.gmra.mxu0 %v20
  %v110 = vpop.f32.mrf.mxu0
  %v111 = vadd.f32 %v42, %v110
  %v112 = vpop.f32.mrf.mxu0
  %113 = vdwg.mxu0
  %v114 = vmax.f32 %v111, 0.0
  %v115 = vld [vmem:[%s3] sm:$0xff]
  %v116 = vld [vmem:[%s3 + $0x8] sm:$0xff]
  %v117 = vld [vmem:[%s3 + $0x10] sm:$0xff]
  %v118 = vld [vmem:[%s3 + $0x18] sm:$0xff]
  %v119 = vld [vmem:[%s4] sm:$0x1]
  %v121 = vlaneseq
  %v122 = vshrl.u32 %v121, 7
  %v123 = vsub.s32 0, %v122
  %v124 = vrot.slane %v119, %v123
  %vm126 = vcmask 261120
  %v128 = vsel %vm126, %v114, 0
  %130 = vmatprep.subr.mxu0 0.0
  %131 = vmatpush1.msra.mxu0 0.0
  %132 = vmatprep.subr.mxu0 0.0
  %133 = vmatpush1.msra.mxu0 0.0
  %134 = vmatprep.subr.mxu0 0.0
  %135 = vmatpush1.msra.mxu0 0.0
  %136 = vmatprep.subr.mxu0 0.0
  %137 = vmatpush1.msra.mxu0 0.0
  %138 = vmatprep.subr.mxu0 0.0
  %139 = vmatpush1.msra.mxu0 0.0
  %140 = vmatprep.subr.mxu0 0.0
  %141 = vmatpush1.msra.mxu0 0.0
  %142 = vmatprep.subr.mxu0 0.0
  %143 = vmatpush1.msra.mxu0 0.0
  %144 = vmatprep.subr.mxu0 0.0
  %145 = vmatpush1.msra.mxu0 0.0
  %146 = vmatprep.subr.mxu0 0.0
  %147 = vmatpush1.msra.mxu0 0.0
  %148 = vmatprep.subr.mxu0 0.0
  %149 = vmatpush1.msra.mxu0 0.0
  %150 = vmatprep.subr.mxu0 0.0
  %151 = vmatpush1.msra.mxu0 0.0
  %152 = vmatprep.subr.mxu0 0.0
  %153 = vmatpush1.msra.mxu0 0.0
  %154 = vmatprep.subr.mxu0 0.0
  %155 = vmatpush1.msra.mxu0 %v118
  %156 = vmatprep.subr.mxu0 0.0
  %157 = vmatpush1.msra.mxu0 %v117
  %158 = vmatprep.subr.mxu0 0.0
  %159 = vmatpush1.msra.mxu0 %v116
  %160 = vmatprep.subr.mxu0 0.0
  %161 = vmatpush1.msra.mxu0 %v115
  %162 = vmatprep.subr.mxu0 0.0
  %163 = vmatpush2.msra.mxu0 0.0
  %164 = vmatprep.subr.mxu0 0.0
  %165 = vmatpush2.msra.mxu0 0.0
  %166 = vmatprep.subr.mxu0 0.0
  %167 = vmatpush2.msra.mxu0 0.0
  %168 = vmatprep.subr.mxu0 0.0
  %169 = vmatpush2.msra.mxu0 0.0
  %170 = vmatprep.subr.mxu0 0.0
  %171 = vmatpush2.msra.mxu0 0.0
  %172 = vmatprep.subr.mxu0 0.0
  %173 = vmatpush2.msra.mxu0 0.0
  %174 = vmatprep.subr.mxu0 0.0
  %175 = vmatpush2.msra.mxu0 0.0
  %176 = vmatprep.subr.mxu0 0.0
  %177 = vmatpush2.msra.mxu0 0.0
  %178 = vmatprep.subr.mxu0 0.0
  %179 = vmatpush2.msra.mxu0 0.0
  %180 = vmatprep.subr.mxu0 0.0
  %181 = vmatpush2.msra.mxu0 0.0
  %182 = vmatprep.subr.mxu0 0.0
  %183 = vmatpush2.msra.mxu0 0.0
  %184 = vmatprep.subr.mxu0 0.0
  %185 = vmatpush2.msra.mxu0 0.0
  %186 = vmatprep.subr.mxu0 0.0
  %187 = vmatpush2.msra.mxu0 0.0
  %188 = vmatprep.subr.mxu0 0.0
  %189 = vmatpush2.msra.mxu0 0.0
  %190 = vmatprep.subr.mxu0 0.0
  %191 = vmatpush2.msra.mxu0 0.0
  %192 = vmatprep.subr.mxu0 0.0
  %193 = vmatpush2.msra.mxu0 0.0
  %194 = vmatprep.mubr.f32.mxu0 0.0
  %195 = vmatmul.mubr.f32.gmra.mxu0 %v128
  %v196 = vpop.f32.mrf.mxu0
  %v197 = vadd.f32 %v124, %v196
  %v198 = vpop.f32.mrf.mxu0
  %199 = vdwg.mxu0
  %v200 = vsub.f32 0.0, %v197
  %v201 = vmul.f32 %v200, 1.442695
  %v202 = vpow.pop %v201
  %v203 = vadd.f32 %v202, 1.0
  %v204 = vrcp.pop %v203
  %v205 = vmul.f32 1.0, %v204
  %vm206 = vcmask 15360
  %207 = vst.msk [vmem:[%s5] sm:$0xff] %vm206, %v205
  // Predicated region
  $region22: #{tpu_custom_call.1} parent=0 // pred_check
    _
  $region23: #{tpu_custom_call.1} parent=0 // pred_check_branch
    %209 = sbr.rel (0) target = $region25
  $region24: #{tpu_custom_call.1} parent=0 // pred_region
    _
  $region25: #{tpu_custom_call.1} parent=0 // pred_fallthru
    _
  // Predicated region
  $region26: #{tpu_custom_call.1} parent=0 // pred_check
    _
  $region27: #{tpu_custom_call.1} parent=0 // pred_check_branch
    %211 = sbr.rel (0) target = $region29
  $region28: #{tpu_custom_call.1} parent=0 // pred_region
    _
  $region29: #{tpu_custom_call.1} parent=0 // pred_fallthru
    _

</llo_original>
